<compile_context>
chip_gen: v7x
topology: tpu7x:2x2x1
jax: 0.10.0
libtpu: 0.0.40
codegen_flags: <defaults>
</compile_context>

<pallas_src>
import jax
import jax.numpy as jnp
from jax.experimental import pallas as pl
from jax.experimental.pallas import tpu as pltpu

_LANES = 128
_TM = 8192                      # rows per tile on the large-N path
_VMEM_LIMIT = 32 * 1024 * 1024  # raises v5e's 16 MiB default; safe everywhere


def _small_kernel(margin_ref, pos_ref, neg_ref, out_ref):
    """Single-tile path: full reduce in-kernel, scalar SMEM output."""
    m = margin_ref[0]
    hinge = jnp.maximum(
        pos_ref[...].astype(jnp.float32) - neg_ref[...].astype(jnp.float32) + m,
        0.0)
    out_ref[0, 0] = jnp.sum(hinge)


def _make_tiled_kernel(has_partial_block):
    """Large-N path: lane-dense per-tile partial sums (row-axis reduce only)."""

    def kernel(rows_ref, margin_ref, pos_ref, neg_ref, out_ref):
        m = margin_ref[0]
        hinge = jnp.maximum(
            pos_ref[...].astype(jnp.float32) - neg_ref[...].astype(jnp.float32) + m,
            0.0)

        if has_partial_block:
            tm = pos_ref.shape[0]
            rows_left = rows_ref[0] - pl.program_id(0) * tm

            @pl.when(rows_left >= tm)
            def _():
                out_ref[...] = jnp.sum(hinge, axis=0).reshape(1, 1, _LANES)

            @pl.when(rows_left < tm)
            def _():
                # Only the final (partial) tile pays for the mask; rows beyond
                # `rows` (Pallas-padded, unspecified contents) are zeroed
                # before the reduce.
                row = jax.lax.broadcasted_iota(jnp.int32, hinge.shape, 0)
                masked = jnp.where(row < rows_left, hinge, 0.0)
                out_ref[...] = jnp.sum(masked, axis=0).reshape(1, 1, _LANES)
        else:
            out_ref[...] = jnp.sum(hinge, axis=0).reshape(1, 1, _LANES)

    return kernel


@jax.jit
def margin_loss(pos, neg, margin):
    """sum(max(pos - neg + margin, 0)) computed with a Pallas TPU kernel."""
    pos_f = pos.reshape(-1)
    neg_f = neg.reshape(-1)
    n = pos_f.shape[0]
    margin_f = jnp.asarray(margin, dtype=jnp.float32)

    rows = n // _LANES
    n_main = rows * _LANES
    has_tail = n_main != n  # static at trace time

    # <128-element tail handled with a single jnp expression (no full-array
    # pad copy of the inputs).
    tail = jnp.float32(0.0)
    if has_tail:
        tail = jnp.sum(jnp.maximum(
            pos_f[n_main:].astype(jnp.float32)
            - neg_f[n_main:].astype(jnp.float32) + margin_f, 0.0))

    if rows == 0:
        return tail

    pos2 = pos_f[:n_main].reshape(rows, _LANES)
    neg2 = neg_f[:n_main].reshape(rows, _LANES)
    margin_arr = margin_f.reshape(1)

    itemsize = jnp.dtype(pos.dtype).itemsize
    cost = pl.CostEstimate(flops=3 * n_main, transcendentals=0,
                           bytes_accessed=2 * n_main * itemsize)

    if rows <= _TM:
        # Small-N fast path: one full-array block, in-kernel full reduction,
        # scalar SMEM output (no external jnp.sum dispatch).
        out = pl.pallas_call(
            _small_kernel,
            out_shape=jax.ShapeDtypeStruct((1, 1), jnp.float32),
            grid=(1,),
            in_specs=[
                pl.BlockSpec(memory_space=pltpu.SMEM),           # margin
                pl.BlockSpec((rows, _LANES), lambda i: (0, 0)),  # pos
                pl.BlockSpec((rows, _LANES), lambda i: (0, 0)),  # neg
            ],
            out_specs=pl.BlockSpec(memory_space=pltpu.SMEM),
            cost_estimate=cost,
        )(margin_arr, pos2, neg2)
        main = out[0, 0]
    else:
        num_tiles = pl.cdiv(rows, _TM)
        has_partial = (rows % _TM) != 0
        rows_arr = jnp.full((1,), rows, dtype=jnp.int32)

        partials = pl.pallas_call(
            _make_tiled_kernel(has_partial),
            out_shape=jax.ShapeDtypeStruct((num_tiles, 1, _LANES), jnp.float32),
            grid=(num_tiles,),
            in_specs=[
                pl.BlockSpec(memory_space=pltpu.SMEM),          # rows (int32)
                pl.BlockSpec(memory_space=pltpu.SMEM),          # margin (f32)
                pl.BlockSpec((_TM, _LANES), lambda i: (i, 0)),  # pos tile
                pl.BlockSpec((_TM, _LANES), lambda i: (i, 0)),  # neg tile
            ],
            out_specs=pl.BlockSpec((1, 1, _LANES), lambda i: (i, 0, 0)),
            compiler_params=pltpu.CompilerParams(
                dimension_semantics=("parallel",),   # v7x: shard tiles over TCs
                vmem_limit_bytes=_VMEM_LIMIT),
            cost_estimate=cost,
        )(rows_arr, margin_arr, pos2, neg2)
        main = jnp.sum(partials)

    if has_tail:
        return main + tail
    return main


if __name__ == "__main__":
    key = jax.random.PRNGKey(0)
    k_pos, k_neg = jax.random.split(key)
    margin = 1.0

    # 1) Per-example scores (the stated B=256 use case) -> small SMEM-scalar path.
    batch = 256
    pos = jax.random.normal(k_pos, (batch,), dtype=jnp.float32)
    neg = jax.random.normal(k_neg, (batch,), dtype=jnp.float32)
    loss = jax.block_until_ready(margin_loss(pos, neg, margin))
    ref = jnp.sum(jnp.maximum(pos - neg + margin, 0.0))
    assert jnp.allclose(loss, ref, rtol=1e-5, atol=1e-5), (loss, ref)

    # 2) Non-128-aligned size -> aligned prefix + jnp tail path.
    batch2 = 1000
    k3, k4 = jax.random.split(k_neg)
    pos2 = jax.random.normal(k3, (batch2,), dtype=jnp.float32)
    neg2 = jax.random.normal(k4, (batch2,), dtype=jnp.float32)
    loss2 = jax.block_until_ready(margin_loss(pos2, neg2, margin))
    ref2 = jnp.sum(jnp.maximum(pos2 - neg2 + margin, 0.0))
    assert jnp.allclose(loss2, ref2, rtol=1e-5, atol=1e-5), (loss2, ref2)

    # 3) Large unaligned size -> tiled path with pl.when-gated partial block
    #    and a lane tail (rows > _TM, rows % _TM != 0, n % 128 != 0).
    n3 = _TM * _LANES + 51_331
    k5, k6 = jax.random.split(k4)
    pos3 = jax.random.normal(k5, (n3,), dtype=jnp.float32)
    neg3 = jax.random.normal(k6, (n3,), dtype=jnp.float32)
    loss3 = jax.block_until_ready(margin_loss(pos3, neg3, margin))
    ref3 = jnp.sum(jnp.maximum(pos3 - neg3 + margin, 0.0))
    assert jnp.allclose(loss3, ref3, rtol=5e-4, atol=1e-2), (loss3, ref3)

    print("KERNEL_OK")
</pallas_src>

<mosaic_0001>
module attributes {stable_mosaic.version = 11 : i64} {
  func.func @_small_kernel(%arg0: i32, %arg1: memref<1xf32, #tpu.memory_space<smem>>, %arg2: memref<2x128xf32, #tpu.memory_space<vmem>>, %arg3: memref<2x128xf32, #tpu.memory_space<vmem>>, %arg4: memref<1x1xf32, #tpu.memory_space<smem>>) attributes {dimension_semantics = [#tpu.dimension_semantics<arbitrary>], iteration_bounds = array<i64: 1>, scalar_prefetch = 0 : i64, scratch_operands = 0 : i64, tpu.core_type = #tpu.core_type<tc>, window_params = [{transform_indices = @transform_0, window_bounds = array<i64: 1>}, {pipeline_mode = #tpu.pipeline_mode<synchronous>, transform_indices = @transform_1, window_bounds = array<i64: 2, 128>}, {pipeline_mode = #tpu.pipeline_mode<synchronous>, transform_indices = @transform_2, window_bounds = array<i64: 2, 128>}, {transform_indices = @transform_3, window_bounds = array<i64: 1, 1>}]} {
    %c0 = arith.constant 0 : index
    %0 = memref.load %arg1[%c0] : memref<1xf32, #tpu.memory_space<smem>>
    %c0_0 = arith.constant 0 : index
    %c0_1 = arith.constant 0 : index
    %1 = vector.load %arg2[%c0_0, %c0_1] : memref<2x128xf32, #tpu.memory_space<vmem>>, vector<2x128xf32>
    %c0_2 = arith.constant 0 : index
    %c0_3 = arith.constant 0 : index
    %2 = vector.load %arg3[%c0_2, %c0_3] : memref<2x128xf32, #tpu.memory_space<vmem>>, vector<2x128xf32>
    %3 = arith.subf %1, %2 : vector<2x128xf32>
    %4 = vector.broadcast %0 : f32 to vector<2x128xf32>
    %5 = arith.addf %3, %4 : vector<2x128xf32>
    %cst = arith.constant 0.000000e+00 : f32
    %6 = vector.broadcast %cst : f32 to vector<2x128xf32>
    %7 = arith.maximumf %5, %6 : vector<2x128xf32>
    %8 = vector.shape_cast %7 : vector<2x128xf32> to vector<1x2x128xf32>
    %cst_4 = arith.constant dense<0.000000e+00> : vector<1xf32>
    %9 = vector.multi_reduction <add>, %8, %cst_4 [1, 2] : vector<1x2x128xf32> to vector<1xf32>
    %10 = vector.shape_cast %9 : vector<1xf32> to vector<1x1x1xf32>
    %11 = vector.extract %10[0, 0, 0] : f32 from vector<1x1x1xf32>
    %c0_5 = arith.constant 0 : index
    %c0_6 = arith.constant 0 : index
    %12 = memref.load %arg4[%c0_5, %c0_6] : memref<1x1xf32, #tpu.memory_space<smem>>
    memref.store %11, %arg4[%c0_5, %c0_6] : memref<1x1xf32, #tpu.memory_space<smem>>
    return
  }
  func.func @transform_0(%arg0: i32) -> i32 {
    %c0_i32 = arith.constant 0 : i32
    %c0_i32_0 = arith.constant 0 : i32
    return %c0_i32 : i32
  }
  func.func @transform_1(%arg0: i32) -> (i32, i32) {
    %c0_i32 = arith.constant 0 : i32
    %c0_i32_0 = arith.constant 0 : i32
    %c0_i32_1 = arith.constant 0 : i32
    return %c0_i32, %c0_i32_0 : i32, i32
  }
  func.func @transform_2(%arg0: i32) -> (i32, i32) {
    %c0_i32 = arith.constant 0 : i32
    %c0_i32_0 = arith.constant 0 : i32
    %c0_i32_1 = arith.constant 0 : i32
    return %c0_i32, %c0_i32_0 : i32, i32
  }
  func.func @transform_3(%arg0: i32) -> (i32, i32) {
    %c0_i32 = arith.constant 0 : i32
    %c0_i32_0 = arith.constant 0 : i32
    %c0_i32_1 = arith.constant 0 : i32
    return %c0_i32, %c0_i32_0 : i32, i32
  }
}

</mosaic_0001>

<llo_original>
// kernel: margin_loss.1
$region0: #{margin_loss.1}
  #allocation0 [shape = 'u32[]', space=smem, size = 0x4, offset = 0x4, fixed_abs, tag = 'smem constant byte address 0x4 - core index']
  #allocation1 [shape = 'u32[144,128]{1,0:T(1,128)}', space=vmem, size = 0x12000, scoped, tag = 'internal scratch']
  #allocation2 [shape = 'f32[1]{0:T(128)S(6)}', space=smem, size = 0x200, scoped, tag = 'scoped memory for margin_loss.1']
  %s0 = inlined_call_operand.<no memory space> [shape: f32[1], index: 0, kind: input, shape index: {}]
  %s1 = inlined_call_operand.vmem [shape: f32[2,128], index: 1, kind: input, shape index: {}]
  %s2 = inlined_call_operand.vmem [shape: f32[2,128], index: 2, kind: input, shape index: {}]
  %s3 = inlined_call_operand.hbm [shape: f32[1,1], index: 3, kind: output, shape index: {}]
  %s4 = sld [smem:[#allocation0]]
  $region22: #{margin_loss.1} parent=0
    _
  %s6 = ssub.s32 1, %s4
  %s7 = scalar_select 0, %s6, %s4
  %8 = sst [smem:[#allocation2]] %s0
  $region1: #{margin_loss.1} parent=0
    #allocation3 [shape = 'u8[512]{0}', space=smem, size = 0x200, scoped, tag = 'output window, operand 0, single buffered']
    #allocation4 [shape = 's32[1]{0}', space=sflag, size = 0x4, scoped, tag = 'scoped memory for margin_loss.1']
    %9 = vsyncpa [#allocation4], 0
    // Predicated region
    $region2: #{margin_loss.1} parent=1 // pred_check
      _
    $region3: #{margin_loss.1} parent=1 // pred_check_branch
      %11 = sbr.rel (0) target = $region5
    $region4: #{margin_loss.1} parent=1 // pred_region
      _
    $region5: #{margin_loss.1} parent=1 // pred_fallthru
      _
    // Predicated region
    $region6: #{margin_loss.1} parent=1 // pred_check
      _
    $region7: #{margin_loss.1} parent=1 // pred_check_branch
      %13 = sbr.rel (0) target = $region9
    $region8: #{margin_loss.1} parent=1 // pred_region
      _
    $region9: #{margin_loss.1} parent=1 // pred_fallthru
      _
    // Predicated region
    $region10: #{margin_loss.1} parent=1 // pred_check
      _
    $region11: #{margin_loss.1} parent=1 // pred_check_branch
      %15 = sbr.rel (0) target = $region13
    $region12: #{margin_loss.1} parent=1 // pred_region
      _
    $region13: #{margin_loss.1} parent=1 // pred_fallthru
      _
    %s16 = sld [smem:[#allocation2]]
    %v17 = vld [vmem:[%s1] sm:$0x3]
    %v18 = vld [vmem:[%s2] sm:$0x3]
    %v19 = vsub.f32 %v17, %v18
    %v20 = vstv %s16
    %v21 = vadd.f32 %v19, %v20
    %v22 = vmax.f32 %v21, 0.0
    %vm23 = vcmask 1041408
    %v24 = vsel %vm23, %v22, 0.0
    %25 = vadd.xlane.f32.xlu0 %v24
    %v26 = vpop.xlane.xlu0 %25
    %v27 = vrot.slane %v26, 4
    %v28 = vadd.f32 %v26, %v27
    %v29 = vrot.slane %v28, 2
    %v30 = vadd.f32 %v28, %v29
    %v31 = vrot.slane %v30, 1
    %v32 = vadd.f32 %v30, %v31
    %s33 = vtos %v32
    %s34 = scalar_lea.smem [#allocation3], 0
    %35 = sst [smem:[%s34]] %s33
    // Predicated region
    $region14: #{margin_loss.1} parent=1 // pred_check
      _
    $region15: #{margin_loss.1} parent=1 // pred_check_branch
      %37 = sbr.rel (0) target = $region17
    $region16: #{margin_loss.1} parent=1 // pred_region
      %s39 = ssub.s32 16, 16
      %40 = vsyncadd [#allocation4], %s39
      %43 = dma.smem_to_hbm [#allocation3], 16, %s3, [#allocation4]
    $region17: #{margin_loss.1} parent=1 // pred_fallthru
      _
    // Predicated region
    $region18: #{margin_loss.1} parent=1 // pred_check
      _
    $region19: #{margin_loss.1} parent=1 // pred_check_branch
      %45 = sbr.rel (0) target = $region21
    $region20: #{margin_loss.1} parent=1 // pred_region
      %46 = dma.done [#allocation4], 16
    $region21: #{margin_loss.1} parent=1 // pred_fallthru
      _
    %47 = sfence
    %48 = vsyncpa [#allocation4], 1

</llo_original>
